<compile_context>
chip_gen: v7x
topology: tpu7x:2x2x1
jax: 0.10.0
libtpu: 0.0.40
codegen_flags: <defaults>
</compile_context>

<pallas_src>
import functools
import math

import jax
import jax.numpy as jnp
from jax.experimental import pallas as pl
from jax.experimental.pallas import tpu as pltpu


_INV_SQRT2 = 1.0 / math.sqrt(2.0)
_SQRT_2_OVER_PI = math.sqrt(2.0 / math.pi)

# Weights stay fully VMEM-resident (single N tile, DMA'd exactly once) when the
# compute-dtype slab (w_h + w_g) is at most this big.  Budgeted per-TensorCore for
# v7x (64 MiB VMEM/TC, each core holds its own copy); conservative on v5e/v6e (128 MiB).
_WEIGHT_RESIDENT_MAX_BYTES = 12 * 1024 * 1024
# Per-grid-step working-set budget (double-buffered blocks + f32 epilogue temporaries).
_VMEM_BUDGET_BYTES = 40 * 1024 * 1024


def _round_up(a, b):
    return ((a + b - 1) // b) * b


def _cdiv(a, b):
    return (a + b - 1) // b


def _geglu_kernel(x_ref, wh_ref, wg_ref, bh_ref, bg_ref, o_ref, *,
                  compute_dtype, approximate_gelu):
    # Cast x to the MXU compute dtype inside the kernel (VPU op hidden under the MXU)
    # instead of a separate wrapper-side XLA pass over HBM.
    x = x_ref[...].astype(compute_dtype)
    h = jnp.dot(x, wh_ref[...], preferred_element_type=jnp.float32) + bh_ref[...]
    gate = jnp.dot(x, wg_ref[...], preferred_element_type=jnp.float32) + bg_ref[...]
    if approximate_gelu:
        # tanh-based gelu -> EUP (its own VLIW slot); cheaper than the erf VALU
        # polynomial on small-K SpatialTransformer shapes.
        g = 0.5 * gate * (1.0 + jnp.tanh(
            _SQRT_2_OVER_PI * (gate + 0.044715 * gate * gate * gate)))
    else:
        # Exact (erf-based) GELU in f32, matching torch.nn.functional.gelu default.
        g = 0.5 * gate * (1.0 + jax.lax.erf(gate * _INV_SQRT2))
    o_ref[...] = (h * g).astype(o_ref.dtype)


def prepare_geglu_params(w, b, *, compute_dtype=jnp.bfloat16):
    """Split the fused Linear(dim_in, 2*dim_out) weight into h/gate halves and cast.

    Call once per layer (hoists the split / cast / bias-reshape HBM passes out of the
    per-forward-call path).  w: (dim_in, 2*dim_out) pre-transposed Linear weight,
    b: (2*dim_out,) bias.
    """
    compute_dtype = jnp.dtype(compute_dtype)
    dim_in, two_dim_out = w.shape
    dim_out = two_dim_out // 2
    return {
        "w_h": w[:, :dim_out].astype(compute_dtype),
        "w_g": w[:, dim_out:].astype(compute_dtype),
        "b_h": b[:dim_out].reshape(1, dim_out).astype(jnp.float32),
        "b_g": b[dim_out:].reshape(1, dim_out).astype(jnp.float32),
        "compute_dtype": compute_dtype,
    }


def geglu_apply(x, params, *, tm=512, tn=256, out_dtype=None, approximate_gelu=False):
    """out = h * gelu(gate) with (h, gate) = split(x @ w + b, 2, axis=-1)."""
    w_h, w_g = params["w_h"], params["w_g"]
    b_h, b_g = params["b_h"], params["b_g"]
    compute_dtype = jnp.dtype(params["compute_dtype"])

    *lead, dim_in = x.shape
    dim_out = w_h.shape[1]
    m = 1
    for d in lead:
        m *= d
    out_dtype = jnp.dtype(out_dtype) if out_dtype is not None else x.dtype

    x_item = jnp.dtype(x.dtype).itemsize
    c_item = compute_dtype.itemsize
    o_item = out_dtype.itemsize
    pack = (8 * 4) // c_item          # sublane pack: 8 (f32), 16 (bf16)

    def vmem_estimate(tm_e, tn_e):
        return (2 * tm_e * dim_in * x_item        # x block, double buffered
                + 4 * dim_in * tn_e * c_item      # w_h + w_g blocks, double buffered
                + 2 * tm_e * tn_e * o_item        # out block, double buffered
                + 4 * tm_e * tn_e * 4             # f32 epilogue temporaries
                + 8 * tn_e * 4)                   # biases

    # ---- tile selection ---------------------------------------------------------
    w_bytes = 2 * dim_in * dim_out * c_item
    weights_resident = (w_bytes <= _WEIGHT_RESIDENT_MAX_BYTES
                        and vmem_estimate(pack, dim_out) <= _VMEM_BUDGET_BYTES)
    if weights_resident:
        # Single N tile: weight block index is constant across the grid, so both
        # halves are fetched from HBM exactly once and stay VMEM-resident.
        tn_eff = dim_out
    else:
        tn_eff = min(_round_up(tn, 128), _round_up(dim_out, 128))

    tm_eff = min(_round_up(tm, pack), _round_up(m, pack))
    while tm_eff > pack and vmem_estimate(tm_eff, tn_eff) > _VMEM_BUDGET_BYTES:
        tm_eff = max(pack, _round_up(tm_eff // 2, pack))

    m_tiles = _cdiv(m, tm_eff)
    n_tiles = _cdiv(dim_out, tn_eff)
    if n_tiles == 1 and m_tiles < 2 and m > pack:
        # v7x shards "parallel" grid axes across 2 TensorCores; keep >= 2 blocks.
        tm_eff = _round_up(_cdiv(m, 2), pack)
        m_tiles = _cdiv(m, tm_eff)
    grid = (m_tiles, n_tiles)

    vmem_limit = int(max(32 * 1024 * 1024,
                         min(int(1.5 * vmem_estimate(tm_eff, tn_eff)),
                             96 * 1024 * 1024)))

    # No padding / pre-cast of x: Pallas masks ragged last blocks, the dtype cast
    # happens in-kernel, and the output is produced at its exact (m, dim_out) shape.
    x2 = x.reshape(m, dim_in)

    w_fetches = 1 if weights_resident else m_tiles
    cost = pl.CostEstimate(
        flops=2 * m * dim_in * 2 * dim_out,
        transcendentals=m * dim_out,
        bytes_accessed=(m * dim_in * x_item                        # x streamed once
                        + w_fetches * 2 * dim_in * dim_out * c_item
                        + w_fetches * 2 * dim_out * 4              # biases
                        + m * dim_out * o_item),
    )

    kernel = functools.partial(_geglu_kernel, compute_dtype=compute_dtype,
                               approximate_gelu=approximate_gelu)

    out = pl.pallas_call(
        kernel,
        out_shape=jax.ShapeDtypeStruct((m, dim_out), out_dtype),
        grid_spec=pltpu.PrefetchScalarGridSpec(
            num_scalar_prefetch=0,
            grid=grid,
            in_specs=[
                pl.BlockSpec((tm_eff, dim_in), lambda i, j: (i, 0)),
                pl.BlockSpec((dim_in, tn_eff), lambda i, j: (0, j)),
                pl.BlockSpec((dim_in, tn_eff), lambda i, j: (0, j)),
                pl.BlockSpec((1, tn_eff), lambda i, j: (0, j)),
                pl.BlockSpec((1, tn_eff), lambda i, j: (0, j)),
            ],
            out_specs=pl.BlockSpec((tm_eff, tn_eff), lambda i, j: (i, j)),
        ),
        compiler_params=pltpu.CompilerParams(
            dimension_semantics=("parallel", "parallel"),
            vmem_limit_bytes=vmem_limit,
        ),
        cost_estimate=cost,
    )(x2, w_h, w_g, b_h, b_g)

    return out.reshape(*lead, dim_out)


def geglu(x, w, b, *, compute_dtype=jnp.bfloat16, **kwargs):
    """Convenience wrapper: prepare + apply in one call.

    For production use, hoist prepare_geglu_params() out of the per-call path.
    """
    return geglu_apply(x, prepare_geglu_params(w, b, compute_dtype=compute_dtype),
                       **kwargs)


def geglu_reference(x, w, b, compute_dtype=None):
    out_dtype = x.dtype
    if compute_dtype is not None:
        x = x.astype(compute_dtype)
        w = w.astype(compute_dtype)
    proj = jnp.dot(x, w, preferred_element_type=jnp.float32) + b.astype(jnp.float32)
    h, gate = jnp.split(proj, 2, axis=-1)
    return (h * jax.nn.gelu(gate, approximate=False)).astype(out_dtype)


if __name__ == "__main__":
    batch, seq, dim_in, dim_out = 2, 8, 32, 32

    key = jax.random.PRNGKey(0)
    kx, kw, kb = jax.random.split(key, 3)

    # Deterministic "Linear(dim_in, dim_out*2)" parameters (synthetic init).
    bound = 1.0 / math.sqrt(dim_in)
    w = jax.random.uniform(kw, (dim_in, 2 * dim_out), jnp.float32, -bound, bound)
    b = jax.random.uniform(kb, (2 * dim_out,), jnp.float32, -bound, bound)
    x = jax.random.normal(kx, (batch, seq, dim_in), jnp.float32)

    ref_f32 = geglu_reference(x, w, b)

    # 1) f32 compute path: must match the exact f32 reference tightly.
    out_f32 = geglu(x, w, b, compute_dtype=jnp.float32)
    jax.block_until_ready(out_f32)
    assert out_f32.shape == (batch, seq, dim_out)
    assert jnp.allclose(out_f32, ref_f32, atol=1e-5, rtol=1e-5), "f32 mismatch vs reference"

    # 2) default bf16-matmul path with hoisted (once-per-layer) weight prep.
    params_bf16 = prepare_geglu_params(w, b, compute_dtype=jnp.bfloat16)
    out_bf16 = geglu_apply(x, params_bf16)
    jax.block_until_ready(out_bf16)
    ref_bf16 = geglu_reference(x, w, b, compute_dtype=jnp.bfloat16)
    assert out_bf16.shape == (batch, seq, dim_out)
    assert jnp.allclose(out_bf16, ref_bf16, atol=1e-4, rtol=1e-4), "bf16 mismatch vs reference"
    assert jnp.allclose(out_bf16, ref_f32, atol=5e-2, rtol=5e-2), "bf16 drifted too far from f32"

    # 3) optional tanh-approximate (EUP) GELU epilogue: runs and stays close to exact.
    out_tanh = geglu_apply(x, params_bf16, approximate_gelu=True)
    jax.block_until_ready(out_tanh)
    assert out_tanh.shape == (batch, seq, dim_out)
    assert jnp.allclose(out_tanh, ref_f32, atol=5e-2, rtol=5e-2), "tanh-gelu drifted too far"

    print("KERNEL_OK")
</pallas_src>

<mosaic_0001>
module attributes {stable_mosaic.version = 11 : i64} {
  func.func @_geglu_kernel(%arg0: i32, %arg1: i32, %arg2: memref<8x32xf32, #tpu.memory_space<vmem>>, %arg3: memref<32x32xf32, #tpu.memory_space<vmem>>, %arg4: memref<32x32xf32, #tpu.memory_space<vmem>>, %arg5: memref<1x32xf32, #tpu.memory_space<vmem>>, %arg6: memref<1x32xf32, #tpu.memory_space<vmem>>, %arg7: memref<8x32xf32, #tpu.memory_space<vmem>>) attributes {dimension_semantics = [#tpu.dimension_semantics<parallel>, #tpu.dimension_semantics<parallel>], iteration_bounds = array<i64: 2, 1>, scalar_prefetch = 0 : i64, scratch_operands = 0 : i64, tpu.core_type = #tpu.core_type<tc>, window_params = [{transform_indices = @transform_0, window_bounds = array<i64: 8, 32>}, {transform_indices = @transform_1, window_bounds = array<i64: 32, 32>}, {transform_indices = @transform_2, window_bounds = array<i64: 32, 32>}, {transform_indices = @transform_3, window_bounds = array<i64: 1, 32>}, {transform_indices = @transform_4, window_bounds = array<i64: 1, 32>}, {transform_indices = @transform_5, window_bounds = array<i64: 8, 32>}]} {
    %c0 = arith.constant 0 : index
    %c0_0 = arith.constant 0 : index
    %0 = vector.load %arg2[%c0, %c0_0] : memref<8x32xf32, #tpu.memory_space<vmem>>, vector<8x32xf32>
    %c0_1 = arith.constant 0 : index
    %c0_2 = arith.constant 0 : index
    %1 = vector.load %arg3[%c0_1, %c0_2] : memref<32x32xf32, #tpu.memory_space<vmem>>, vector<32x32xf32>
    %cst = arith.constant dense<0.000000e+00> : vector<8x32xf32>
    %2 = tpu.matmul %0, %1, %cst {dimension_numbers = #tpu.dot_dimension_numbers<[1], [0], [0], [1], [0, 0, 1, 1], [], []>} : vector<8x32xf32>, vector<32x32xf32>, vector<8x32xf32> -> vector<8x32xf32>
    %c0_3 = arith.constant 0 : index
    %c0_4 = arith.constant 0 : index
    %3 = vector.load %arg5[%c0_3, %c0_4] : memref<1x32xf32, #tpu.memory_space<vmem>>, vector<1x32xf32>
    %4 = vector.broadcast %3 : vector<1x32xf32> to vector<8x32xf32>
    %5 = arith.addf %2, %4 : vector<8x32xf32>
    %c0_5 = arith.constant 0 : index
    %c0_6 = arith.constant 0 : index
    %6 = vector.load %arg4[%c0_5, %c0_6] : memref<32x32xf32, #tpu.memory_space<vmem>>, vector<32x32xf32>
    %cst_7 = arith.constant dense<0.000000e+00> : vector<8x32xf32>
    %7 = tpu.matmul %0, %6, %cst_7 {dimension_numbers = #tpu.dot_dimension_numbers<[1], [0], [0], [1], [0, 0, 1, 1], [], []>} : vector<8x32xf32>, vector<32x32xf32>, vector<8x32xf32> -> vector<8x32xf32>
    %c0_8 = arith.constant 0 : index
    %c0_9 = arith.constant 0 : index
    %8 = vector.load %arg6[%c0_8, %c0_9] : memref<1x32xf32, #tpu.memory_space<vmem>>, vector<1x32xf32>
    %9 = vector.broadcast %8 : vector<1x32xf32> to vector<8x32xf32>
    %10 = arith.addf %7, %9 : vector<8x32xf32>
    %cst_10 = arith.constant 5.000000e-01 : f32
    %11 = vector.broadcast %cst_10 : f32 to vector<8x32xf32>
    %12 = arith.mulf %11, %10 : vector<8x32xf32>
    %cst_11 = arith.constant 0.707106769 : f32
    %13 = vector.broadcast %cst_11 : f32 to vector<8x32xf32>
    %14 = arith.mulf %10, %13 : vector<8x32xf32>
    %15 = math.erf %14 : vector<8x32xf32>
    %cst_12 = arith.constant 1.000000e+00 : f32
    %16 = vector.broadcast %cst_12 : f32 to vector<8x32xf32>
    %17 = arith.addf %16, %15 : vector<8x32xf32>
    %18 = arith.mulf %12, %17 : vector<8x32xf32>
    %19 = arith.mulf %5, %18 : vector<8x32xf32>
    %c0_13 = arith.constant 0 : index
    %c0_14 = arith.constant 0 : index
    %20 = vector.load %arg7[%c0_13, %c0_14] : memref<8x32xf32, #tpu.memory_space<vmem>>, vector<8x32xf32>
    tpu.vector_store %arg7[%c0_13, %c0_14], %19 {strides = array<i32>} : memref<8x32xf32, #tpu.memory_space<vmem>>, vector<8x32xf32>,
    return
  }
  func.func @transform_0(%arg0: i32, %arg1: i32) -> (i32, i32) {
    %c0_i32 = arith.constant 0 : i32
    %c0_i32_0 = arith.constant 0 : i32
    return %arg0, %c0_i32 : i32, i32
  }
  func.func @transform_1(%arg0: i32, %arg1: i32) -> (i32, i32) {
    %c0_i32 = arith.constant 0 : i32
    %c0_i32_0 = arith.constant 0 : i32
    return %c0_i32, %arg1 : i32, i32
  }
  func.func @transform_2(%arg0: i32, %arg1: i32) -> (i32, i32) {
    %c0_i32 = arith.constant 0 : i32
    %c0_i32_0 = arith.constant 0 : i32
    return %c0_i32, %arg1 : i32, i32
  }
  func.func @transform_3(%arg0: i32, %arg1: i32) -> (i32, i32) {
    %c0_i32 = arith.constant 0 : i32
    %c0_i32_0 = arith.constant 0 : i32
    return %c0_i32, %arg1 : i32, i32
  }
  func.func @transform_4(%arg0: i32, %arg1: i32) -> (i32, i32) {
    %c0_i32 = arith.constant 0 : i32
    %c0_i32_0 = arith.constant 0 : i32
    return %c0_i32, %arg1 : i32, i32
  }
  func.func @transform_5(%arg0: i32, %arg1: i32) -> (i32, i32) {
    %c0_i32 = arith.constant 0 : i32
    return %arg0, %arg1 : i32, i32
  }
}

</mosaic_0001>

<llo_original>
// kernel: tpu_custom_call.1
$region0: #{tpu_custom_call.1}
  #allocation0 [shape = 'u32[]', space=smem, size = 0x4, offset = 0x4, fixed_abs, tag = 'smem constant byte address 0x4 - core index']
  #allocation1 [shape = 'u32[144,128]{1,0:T(1,128)}', space=vmem, size = 0x12000, scoped, tag = 'internal scratch']
  %s0 = inlined_call_operand.hbm [shape: f32[16,32], index: 0, kind: input, shape index: {}]
  %s1 = inlined_call_operand.hbm [shape: f32[32,32], index: 1, kind: input, shape index: {}]
  %s2 = inlined_call_operand.hbm [shape: f32[32,32], index: 2, kind: input, shape index: {}]
  %s3 = inlined_call_operand.vmem [shape: f32[1,32], index: 3, kind: input, shape index: {}]
  %s4 = inlined_call_operand.vmem [shape: f32[1,32], index: 4, kind: input, shape index: {}]
  %s5 = inlined_call_operand.hbm [shape: f32[16,32], index: 5, kind: output, shape index: {}]
  %s6 = sld [smem:[#allocation0]]
  $region65: #{tpu_custom_call.1} parent=0
    _
  %s8 = ssub.s32 1, %s6
  %s9 = scalar_select 0, %s8, %s6
  $region1: #{tpu_custom_call.1} parent=0
    #allocation2 [shape = 'u8[8192]{0}', space=vmem, size = 0x2000, scoped, tag = 'input window, operand 0']
    #allocation3 [shape = 's32[2]{0}', space=sflag, size = 0x8, scoped, tag = 'scoped memory for tpu_custom_call.1']
    #allocation4 [shape = 's32[2]{0}', space=sflag, size = 0x8, scoped, tag = 'scoped memory for tpu_custom_call.1']
    #allocation5 [shape = 'u8[16384]{0}', space=vmem, size = 0x4000, scoped, tag = 'input window, operand 1, single buffered']
    #allocation6 [shape = 's32[1]{0}', space=sflag, size = 0x4, scoped, tag = 'scoped memory for tpu_custom_call.1']
    #allocation7 [shape = 'u8[16384]{0}', space=vmem, size = 0x4000, scoped, tag = 'input window, operand 2, single buffered']
    #allocation8 [shape = 'u8[8192]{0}', space=vmem, size = 0x2000, scoped, tag = 'output window, operand 0']
    %10 = vsyncpa [#allocation3], 0
    %s11 = scalar_lea.sflag [#allocation3], 1
    %12 = vsyncpa %s11, 0
    %13 = vsyncpa [#allocation6], 0
    %14 = vsyncpa [#allocation4], 0
    %s15 = scalar_lea.sflag [#allocation4], 1
    %16 = vsyncpa %s15, 0
    loop: start=0, step=1, limit=4
    $region2: #{tpu_custom_call.1} parent=1 // loop_pre_header
      _
    $region3: #{tpu_custom_call.1} parent=1 // loop_header
      %s18 = sphi 0, %s22
      %p19 = scmp.ge.s32.totalorder %s18, 4
      %s25 = sphi 0, %s37
      %s26 = sphi 0, %s33
      %s27 = sphi 0, %s25
      %s28 = sphi 0, %s26
      %s29 = sphi 0, %s27
      %s30 = sphi 0, %s28
      %s40 = sphi 0, %s42
      %s43 = sphi 0, %s40
      %s44 = sphi 0, %s43
      %s60 = sphi 0, %s44
      %s66 = sphi 0, %s68
      %s69 = sphi 0, %s66
      %s70 = sphi 0, %s69
      %s86 = sphi 0, %s70
      %s92 = sphi 0, %s94
      %s95 = sphi 0, %s92
      %s96 = sphi 0, %s95
      %s112 = sphi 0, %s96
      %s118 = sphi 0, %s120
      %s121 = sphi 0, %s118
      %s122 = sphi 0, %s121
      %s138 = sphi 0, %s122
      %s144 = sphi 0, %s146
      %s147 = sphi 0, %s144
      %s148 = sphi 0, %s147
      %s164 = sphi 0, %s148
      %s172 = sphi 0, %s174
      %s175 = sphi 0, %s172
      %s176 = sphi 0, %s175
      %s192 = sphi 0, %s176
    $region4: #{tpu_custom_call.1} parent=1 // loop_header_branch
      %21 = sbr.rel (%p19) target = $region8
    $region5: #{tpu_custom_call.1} parent=1 // loop_body
      %s23 = ssub.s32 %s18, 1
      %s24 = ssub.s32 %s18, 2
      %s31 = sadd.s32 1, %s26
      %p32 = scmp.ge.s32.totalorder %s31, 1
      %s33 = scalar_select %p32, 0, %s31
      %s34 = sadd.s32 1, %s25
      %s35 = scalar_select %p32, %s34, %s25
      %p36 = scmp.ge.s32.totalorder %s35, 2
      %s37 = scalar_select %p36, 0, %s35
      %s38 = ssub.s32 %s25, %s37
      %p39 = scmp.eq.s32.totalorder %s38, 0
      %s41 = sadd.s32 %s40, 1
      %s42 = scalar_select %p39, %s40, %s41
      %p45 = pneg %p39
      %p46 = scmp.eq.s32.totalorder %s18, 1
      %p47 = por %p45, %p46
      %p48 = scmp.ne.s32.totalorder %s40, %s43
      %p49 = scmp.eq.s32.totalorder %s18, 0
      %p50 = por %p48, %p49
      %p51 = scmp.ne.s32.totalorder %s40, %s43
      %p52 = scmp.eq.s32.totalorder %s23, 1
      %p53 = por %p51, %p52
      %p54 = scmp.ne.s32.totalorder %s43, %s44
      %p55 = scmp.eq.s32.totalorder %s23, 0
      %p56 = por %p54, %p55
      %p57 = scmp.ne.s32.totalorder %s43, %s44
      %p58 = scmp.eq.s32.totalorder %s24, 1
      %p59 = por %p57, %p58
      %p61 = scmp.ne.s32.totalorder %s44, %s60
      %p62 = scmp.eq.s32.totalorder %s24, 0
      %p63 = por %p61, %p62
      %s64 = ssub.s32 %s26, %s33
      %p65 = scmp.eq.s32.totalorder %s64, 0
      %s67 = sadd.s32 %s66, 1
      %s68 = scalar_select %p65, %s66, %s67
      %p71 = pneg %p65
      %p72 = scmp.eq.s32.totalorder %s18, 1
      %p73 = por %p71, %p72
      %p74 = scmp.ne.s32.totalorder %s66, %s69
      %p75 = scmp.eq.s32.totalorder %s18, 0
      %p76 = por %p74, %p75
      %p77 = scmp.ne.s32.totalorder %s66, %s69
      %p78 = scmp.eq.s32.totalorder %s23, 1
      %p79 = por %p77, %p78
      %p80 = scmp.ne.s32.totalorder %s69, %s70
      %p81 = scmp.eq.s32.totalorder %s23, 0
      %p82 = por %p80, %p81
      %p83 = scmp.ne.s32.totalorder %s69, %s70
      %p84 = scmp.eq.s32.totalorder %s24, 1
      %p85 = por %p83, %p84
      %p87 = scmp.ne.s32.totalorder %s70, %s86
      %p88 = scmp.eq.s32.totalorder %s24, 0
      %p89 = por %p87, %p88
      %s90 = ssub.s32 %s26, %s33
      %p91 = scmp.eq.s32.totalorder %s90, 0
      %s93 = sadd.s32 %s92, 1
      %s94 = scalar_select %p91, %s92, %s93
      %p97 = pneg %p91
      %p98 = scmp.eq.s32.totalorder %s18, 1
      %p99 = por %p97, %p98
      %p100 = scmp.ne.s32.totalorder %s92, %s95
      %p101 = scmp.eq.s32.totalorder %s18, 0
      %p102 = por %p100, %p101
      %p103 = scmp.ne.s32.totalorder %s92, %s95
      %p104 = scmp.eq.s32.totalorder %s23, 1
      %p105 = por %p103, %p104
      %p106 = scmp.ne.s32.totalorder %s95, %s96
      %p107 = scmp.eq.s32.totalorder %s23, 0
      %p108 = por %p106, %p107
      %p109 = scmp.ne.s32.totalorder %s95, %s96
      %p110 = scmp.eq.s32.totalorder %s24, 1
      %p111 = por %p109, %p110
      %p113 = scmp.ne.s32.totalorder %s96, %s112
      %p114 = scmp.eq.s32.totalorder %s24, 0
      %p115 = por %p113, %p114
      %s116 = ssub.s32 %s26, %s33
      %p117 = scmp.eq.s32.totalorder %s116, 0
      %s119 = sadd.s32 %s118, 1
      %s120 = scalar_select %p117, %s118, %s119
      %p123 = pneg %p117
      %p124 = scmp.eq.s32.totalorder %s18, 1
      %p125 = por %p123, %p124
      %p126 = scmp.ne.s32.totalorder %s118, %s121
      %p127 = scmp.eq.s32.totalorder %s18, 0
      %p128 = por %p126, %p127
      %p129 = scmp.ne.s32.totalorder %s118, %s121
      %p130 = scmp.eq.s32.totalorder %s23, 1
      %p131 = por %p129, %p130
      %p132 = scmp.ne.s32.totalorder %s121, %s122
      %p133 = scmp.eq.s32.totalorder %s23, 0
      %p134 = por %p132, %p133
      %p135 = scmp.ne.s32.totalorder %s121, %s122
      %p136 = scmp.eq.s32.totalorder %s24, 1
      %p137 = por %p135, %p136
      %p139 = scmp.ne.s32.totalorder %s122, %s138
      %p140 = scmp.eq.s32.totalorder %s24, 0
      %p141 = por %p139, %p140
      %s142 = ssub.s32 %s26, %s33
      %p143 = scmp.eq.s32.totalorder %s142, 0
      %s145 = sadd.s32 %s144, 1
      %s146 = scalar_select %p143, %s144, %s145
      %p149 = pneg %p143
      %p150 = scmp.eq.s32.totalorder %s18, 1
      %p151 = por %p149, %p150
      %p152 = scmp.ne.s32.totalorder %s144, %s147
      %p153 = scmp.eq.s32.totalorder %s18, 0
      %p154 = por %p152, %p153
      %p155 = scmp.ne.s32.totalorder %s144, %s147
      %p156 = scmp.eq.s32.totalorder %s23, 1
      %p157 = por %p155, %p156
      %p158 = scmp.ne.s32.totalorder %s147, %s148
      %p159 = scmp.eq.s32.totalorder %s23, 0
      %p160 = por %p158, %p159
      %p161 = scmp.ne.s32.totalorder %s147, %s148
      %p162 = scmp.eq.s32.totalorder %s24, 1
      %p163 = por %p161, %p162
      %p165 = scmp.ne.s32.totalorder %s148, %s164
      %p166 = scmp.eq.s32.totalorder %s24, 0
      %p167 = por %p165, %p166
      %s168 = ssub.s32 %s25, %s37
      %s169 = ssub.s32 %s26, %s33
      %s170 = sor.u32 %s168, %s169
      %p171 = scmp.eq.s32.totalorder %s170, 0
      %s173 = sadd.s32 %s172, 1
      %s174 = scalar_select %p171, %s172, %s173
      %p177 = pneg %p171
      %p178 = scmp.eq.s32.totalorder %s18, 1
      %p179 = por %p177, %p178
      %p180 = scmp.ne.s32.totalorder %s172, %s175
      %p181 = scmp.eq.s32.totalorder %s18, 0
      %p182 = por %p180, %p181
      %p183 = scmp.ne.s32.totalorder %s172, %s175
      %p184 = scmp.eq.s32.totalorder %s23, 1
      %p185 = por %p183, %p184
      %p186 = scmp.ne.s32.totalorder %s175, %s176
      %p187 = scmp.eq.s32.totalorder %s23, 0
      %p188 = por %p186, %p187
      %p189 = scmp.ne.s32.totalorder %s175, %s176
      %p190 = scmp.eq.s32.totalorder %s24, 1
      %p191 = por %p189, %p190
      %p193 = scmp.ne.s32.totalorder %s176, %s192
      %p194 = scmp.eq.s32.totalorder %s24, 0
      %p195 = por %p193, %p194
      %p196 = scmp.le.s32.totalorder 1, %s18
      %p197 = scmp.lt.s32.totalorder %s18, 3
      %p198 = pnand %p196, %p197
      %p199 = pneg %p198
      // Predicated region
      $region9: #{tpu_custom_call.1} parent=5 // pred_check
        _
      $region10: #{tpu_custom_call.1} parent=5 // pred_check_branch
        %201 = sbr.rel (%p198) target = $region12
      $region11: #{tpu_custom_call.1} parent=5 // pred_region
        %s202 = ssub.s32 %s18, 1
        // Predicated region
        $region13: #{tpu_custom_call.1} parent=11 // pred_check
          %p203 = pneg %p82
        $region14: #{tpu_custom_call.1} parent=11 // pred_check_branch
          %205 = sbr.rel (%p203) target = $region16
        $region15: #{tpu_custom_call.1} parent=11 // pred_region
          %s207 = ssub.s32 512, 512
          %208 = vsyncadd [#allocation6], %s207
          %s209 = smul.addr %s28, 128
          %s210 = scalar_lea.hbm %s1, %s209
          %s211 = sshll.u32 [#allocation5], 4
          %s212 = int_to_ptr.vmem [resolvable:$true] %s211
          %217 = dma.hbm_to_vmem [thread:$0]  %s210, 512, %s212, [#allocation6], 128, 128, 8
        $region16: #{tpu_custom_call.1} parent=11 // pred_fallthru
          _
        // Predicated region
        $region17: #{tpu_custom_call.1} parent=11 // pred_check
          %p218 = pneg %p108
        $region18: #{tpu_custom_call.1} parent=11 // pred_check_branch
          %220 = sbr.rel (%p218) target = $region20
        $region19: #{tpu_custom_call.1} parent=11 // pred_region
          %s222 = ssub.s32 512, 512
          %223 = vsyncadd [#allocation6], %s222
          %s224 = smul.addr %s28, 128
          %s225 = scalar_lea.hbm %s2, %s224
          %s226 = sshll.u32 [#allocation7], 4
          %s227 = int_to_ptr.vmem [resolvable:$true] %s226
          %232 = dma.hbm_to_vmem [thread:$0]  %s225, 512, %s227, [#allocation6], 128, 128, 8
        $region20: #{tpu_custom_call.1} parent=11 // pred_fallthru
          _
        // Predicated region
        $region21: #{tpu_custom_call.1} parent=11 // pred_check
          %p233 = pneg %p134
        $region22: #{tpu_custom_call.1} parent=11 // pred_check_branch
          %235 = sbr.rel (%p233) target = $region24
        $region23: #{tpu_custom_call.1} parent=11 // pred_region
          %p236 = scmp.lt.s32.totalorder %s28, 0
          %s237 = scalar_select %p236, %s28, 0
          %s238 = scalar_lea.vmem %s3, %s237
        $region24: #{tpu_custom_call.1} parent=11 // pred_fallthru
          _
        // Predicated region
        $region25: #{tpu_custom_call.1} parent=11 // pred_check
          %p239 = pneg %p160
        $region26: #{tpu_custom_call.1} parent=11 // pred_check_branch
          %241 = sbr.rel (%p239) target = $region28
        $region27: #{tpu_custom_call.1} parent=11 // pred_region
          %p242 = scmp.lt.s32.totalorder %s28, 0
          %s243 = scalar_select %p242, %s28, 0
          %s244 = scalar_lea.vmem %s4, %s243
        $region28: #{tpu_custom_call.1} parent=11 // pred_fallthru
          _
      $region12: #{tpu_custom_call.1} parent=5 // pred_fallthru
        _
      %p245 = scmp.lt.s32.totalorder %s18, 2
      // Predicated region
      $region29: #{tpu_custom_call.1} parent=5 // pred_check
        %p246 = pneg %p245
      $region30: #{tpu_custom_call.1} parent=5 // pred_check_branch
        %248 = sbr.rel (%p246) target = $region32
      $region31: #{tpu_custom_call.1} parent=5 // pred_region
        // Predicated region
        $region33: #{tpu_custom_call.1} parent=31 // pred_check
          %p249 = pneg %p50
        $region34: #{tpu_custom_call.1} parent=31 // pred_check_branch
          %251 = sbr.rel (%p249) target = $region36
        $region35: #{tpu_custom_call.1} parent=31 // pred_region
          %s252 = sand.u32 %s40, 1
          %s253 = scalar_lea.sflag [#allocation3], %s252
          %s254 = sand.u32 %s40, 1
          %s255 = smul.addr %s254, 8
          %s256 = scalar_lea.vmem [#allocation2], %s255
          %s258 = ssub.s32 128, 128
          %259 = vsyncadd %s253, %s258
          %s260 = smul.addr %s25, 128
          %s261 = scalar_lea.hbm %s0, %s260
          %s263 = sshll.u32 %s256, 4
          %s264 = int_to_ptr.vmem [resolvable:$true] %s263
          %266 = dma.hbm_to_vmem [thread:$0]  %s261, 128, %s264, %s253
        $region36: #{tpu_custom_call.1} parent=31 // pred_fallthru
          _
      $region32: #{tpu_custom_call.1} parent=5 // pred_fallthru
        _
      %p267 = scmp.le.s32.totalorder 1, %s18
      %p268 = scmp.lt.s32.totalorder %s18, 3
      %p269 = pnand %p267, %p268
      %p270 = pneg %p269
      // Predicated region
      $region37: #{tpu_custom_call.1} parent=5 // pred_check
        _
      $region38: #{tpu_custom_call.1} parent=5 // pred_check_branch
        %272 = sbr.rel (%p269) target = $region40
      $region39: #{tpu_custom_call.1} parent=5 // pred_region
        %s273 = ssub.s32 %s18, 1
        %s274 = sand.u32 %s43, 1
        %s275 = scalar_lea.sflag [#allocation3], %s274
        %s276 = sand.u32 %s43, 1
        %s277 = smul.addr %s276, 8
        %s278 = scalar_lea.vmem [#allocation2], %s277
        // Predicated region
        $region41: #{tpu_custom_call.1} parent=39 // pred_check
          %p279 = pneg %p56
        $region42: #{tpu_custom_call.1} parent=39 // pred_check_branch
          %281 = sbr.rel (%p279) target = $region44
        $region43: #{tpu_custom_call.1} parent=39 // pred_region
          %282 = dma.done %s275, 128
        $region44: #{tpu_custom_call.1} parent=39 // pred_fallthru
          _
        // Predicated region
        $region45: #{tpu_custom_call.1} parent=39 // pred_check
          %p283 = pneg %p82
        $region46: #{tpu_custom_call.1} parent=39 // pred_check_branch
          %285 = sbr.rel (%p283) target = $region48
        $region47: #{tpu_custom_call.1} parent=39 // pred_region
          %286 = dma.done [#allocation6], 512
        $region48: #{tpu_custom_call.1} parent=39 // pred_fallthru
          _
        // Predicated region
        $region49: #{tpu_custom_call.1} parent=39 // pred_check
          %p287 = pneg %p108
        $region50: #{tpu_custom_call.1} parent=39 // pred_check_branch
          %289 = sbr.rel (%p287) target = $region52
        $region51: #{tpu_custom_call.1} parent=39 // pred_region
          %290 = dma.done [#allocation6], 512
        $region52: #{tpu_custom_call.1} parent=39 // pred_fallthru
          _
        %s291 = sand.u32 %s43, 1
        %s292 = scalar_lea.sflag [#allocation3], %s291
        %s293 = sand.u32 %s43, 1
        %s294 = smul.addr %s293, 8
        %s295 = scalar_lea.vmem [#allocation2], %s294
        %p296 = pneg %p56
        %p297 = pneg %p53
        %p298 = pneg %p82
        %p299 = pneg %p79
        %p300 = pneg %p108
        %p301 = pneg %p105
        %p302 = scmp.lt.s32.totalorder %s28, 0
        %s303 = scalar_select %p302, %s28, 0
        %s304 = scalar_lea.vmem %s3, %s303
        %p305 = pneg %p134
        %p306 = pneg %p131
        %p307 = scmp.lt.s32.totalorder %s28, 0
        %s308 = scalar_select %p307, %s28, 0
        %s309 = scalar_lea.vmem %s4, %s308
        %p310 = pneg %p160
        %p311 = pneg %p157
        %p312 = pneg %p188
        %p313 = pneg %p185
        %s314 = sand.u32 %s175, 1
        %s315 = scalar_lea.sflag [#allocation4], %s314
        %s316 = sand.u32 %s175, 1
        %s317 = smul.addr %s316, 8
        %s318 = scalar_lea.vmem [#allocation8], %s317
        %p319 = scmp.lt.s32.totalorder %s28, 0
        %s320 = scalar_select %p319, %s28, 0
        %s321 = scalar_lea.vmem %s3, %s320
        %p322 = scmp.lt.s32.totalorder %s28, 0
        %s323 = scalar_select %p322, %s28, 0
        %s324 = scalar_lea.vmem %s4, %s323
        %v325 = vld [vmem:[%s278] sm:$0xff]
        %v326 = vld [vmem:[#allocation5] sm:$0xff]
        %v327 = vld [vmem:[#allocation5 + $0x8] sm:$0xff]
        %v328 = vld [vmem:[#allocation5 + $0x10] sm:$0xff]
        %v329 = vld [vmem:[#allocation5 + $0x18] sm:$0xff]
        %v330 = vld [vmem:[%s321] sm:$0x1]
        %v332 = vlaneseq
        %v333 = vshrl.u32 %v332, 7
        %v334 = vsub.s32 0, %v333
        %v335 = vrot.slane %v330, %v334
        %vm337 = vcmask 261120
        %v339 = vsel %vm337, %v325, 0
        %341 = vmatprep.subr.mxu0 0.0
        %342 = vmatpush1.msra.mxu0 %v326
        %343 = vmatprep.subr.mxu0 0.0
        %344 = vmatpush1.msra.mxu0 %v327
        %345 = vmatprep.subr.mxu0 0.0
        %346 = vmatpush1.msra.mxu0 %v328
        %347 = vmatprep.subr.mxu0 0.0
        %348 = vmatpush1.msra.mxu0 %v329
        %349 = vmatprep.subr.mxu0 0.0
        %350 = vmatpush1.msra.mxu0 0.0
        %351 = vmatprep.subr.mxu0 0.0
        %352 = vmatpush1.msra.mxu0 0.0
        %353 = vmatprep.subr.mxu0 0.0
        %354 = vmatpush1.msra.mxu0 0.0
        %355 = vmatprep.subr.mxu0 0.0
        %356 = vmatpush1.msra.mxu0 0.0
        %357 = vmatprep.subr.mxu0 0.0
        %358 = vmatpush1.msra.mxu0 0.0
        %359 = vmatprep.subr.mxu0 0.0
        %360 = vmatpush1.msra.mxu0 0.0
        %361 = vmatprep.subr.mxu0 0.0
        %362 = vmatpush1.msra.mxu0 0.0
        %363 = vmatprep.subr.mxu0 0.0
        %364 = vmatpush1.msra.mxu0 0.0
        %365 = vmatprep.subr.mxu0 0.0
        %366 = vmatpush1.msra.mxu0 0.0
        %367 = vmatprep.subr.mxu0 0.0
        %368 = vmatpush1.msra.mxu0 0.0
        %369 = vmatprep.subr.mxu0 0.0
        %370 = vmatpush1.msra.mxu0 0.0
        %371 = vmatprep.subr.mxu0 0.0
        %372 = vmatpush1.msra.mxu0 0.0
        %373 = vmatprep.subr.mxu0 0.0
        %374 = vmatpush1.msra.mxu0 0.0
        %375 = vmatprep.subr.mxu0 0.0
        %376 = vmatpush1.msra.mxu0 0.0
        %377 = vmatprep.subr.mxu0 0.0
        %378 = vmatpush1.msra.mxu0 0.0
        %379 = vmatprep.subr.mxu0 0.0
        %380 = vmatpush1.msra.mxu0 0.0
        %381 = vmatprep.subr.mxu0 0.0
        %382 = vmatpush1.msra.mxu0 0.0
        %383 = vmatprep.subr.mxu0 0.0
        %384 = vmatpush1.msra.mxu0 0.0
        %385 = vmatprep.subr.mxu0 0.0
        %386 = vmatpush1.msra.mxu0 0.0
        %387 = vmatprep.subr.mxu0 0.0
        %388 = vmatpush1.msra.mxu0 0.0
        %389 = vmatprep.subr.mxu0 0.0
        %390 = vmatpush1.msra.mxu0 0.0
        %391 = vmatprep.subr.mxu0 0.0
        %392 = vmatpush1.msra.mxu0 0.0
        %393 = vmatprep.subr.mxu0 0.0
        %394 = vmatpush1.msra.mxu0 0.0
        %395 = vmatprep.subr.mxu0 0.0
        %396 = vmatpush1.msra.mxu0 0.0
        %397 = vmatprep.subr.mxu0 0.0
        %398 = vmatpush1.msra.mxu0 0.0
        %399 = vmatprep.subr.mxu0 0.0
        %400 = vmatpush1.msra.mxu0 0.0
        %401 = vmatprep.subr.mxu0 0.0
        %402 = vmatpush1.msra.mxu0 0.0
        %403 = vmatprep.subr.mxu0 0.0
        %404 = vmatpush1.msra.mxu0 0.0
        %405 = vmatprep.mubr.f32.mxu0 0.0
        %406 = vmatmul.mubr.f32.gmra.mrb[0].mxu0 %v339
        %v407 = vpop.f32.mrb[0].mxu0
        %v408 = vadd.f32 %v335, %v407
        %v409 = vpop.f32.mrb[0].mxu0
        %410 = vdwg.mxu0
        %v411 = vld [vmem:[#allocation7] sm:$0xff]
        %v412 = vld [vmem:[#allocation7 + $0x8] sm:$0xff]
        %v413 = vld [vmem:[#allocation7 + $0x10] sm:$0xff]
        %v414 = vld [vmem:[#allocation7 + $0x18] sm:$0xff]
        %v415 = vld [vmem:[%s324] sm:$0x1]
        %v417 = vlaneseq
        %v418 = vshrl.u32 %v417, 7
        %v419 = vsub.s32 0, %v418
        %v420 = vrot.slane %v415, %v419
        %422 = vmatprep.subr.mxu0 0.0
        %423 = vmatpush1.msra.mxu0 %v411
        %424 = vmatprep.subr.mxu0 0.0
        %425 = vmatpush1.msra.mxu0 %v412
        %426 = vmatprep.subr.mxu0 0.0
        %427 = vmatpush1.msra.mxu0 %v413
        %428 = vmatprep.subr.mxu0 0.0
        %429 = vmatpush1.msra.mxu0 %v414
        %430 = vmatprep.subr.mxu0 0.0
        %431 = vmatpush1.msra.mxu0 0.0
        %432 = vmatprep.subr.mxu0 0.0
        %433 = vmatpush1.msra.mxu0 0.0
        %434 = vmatprep.subr.mxu0 0.0
        %435 = vmatpush1.msra.mxu0 0.0
        %436 = vmatprep.subr.mxu0 0.0
        %437 = vmatpush1.msra.mxu0 0.0
        %438 = vmatprep.subr.mxu0 0.0
        %439 = vmatpush1.msra.mxu0 0.0
        %440 = vmatprep.subr.mxu0 0.0
        %441 = vmatpush1.msra.mxu0 0.0
        %442 = vmatprep.subr.mxu0 0.0
        %443 = vmatpush1.msra.mxu0 0.0
        %444 = vmatprep.subr.mxu0 0.0
        %445 = vmatpush1.msra.mxu0 0.0
        %446 = vmatprep.subr.mxu0 0.0
        %447 = vmatpush1.msra.mxu0 0.0
        %448 = vmatprep.subr.mxu0 0.0
        %449 = vmatpush1.msra.mxu0 0.0
        %450 = vmatprep.subr.mxu0 0.0
        %451 = vmatpush1.msra.mxu0 0.0
        %452 = vmatprep.subr.mxu0 0.0
        %453 = vmatpush1.msra.mxu0 0.0
        %454 = vmatprep.subr.mxu0 0.0
        %455 = vmatpush1.msra.mxu0 0.0
        %456 = vmatprep.subr.mxu0 0.0
        %457 = vmatpush1.msra.mxu0 0.0
        %458 = vmatprep.subr.mxu0 0.0
        %459 = vmatpush1.msra.mxu0 0.0
        %460 = vmatprep.subr.mxu0 0.0
        %461 = vmatpush1.msra.mxu0 0.0
        %462 = vmatprep.subr.mxu0 0.0
        %463 = vmatpush1.msra.mxu0 0.0
        %464 = vmatprep.subr.mxu0 0.0
        %465 = vmatpush1.msra.mxu0 0.0
        %466 = vmatprep.subr.mxu0 0.0
        %467 = vmatpush1.msra.mxu0 0.0
        %468 = vmatprep.subr.mxu0 0.0
        %469 = vmatpush1.msra.mxu0 0.0
        %470 = vmatprep.subr.mxu0 0.0
        %471 = vmatpush1.msra.mxu0 0.0
        %472 = vmatprep.subr.mxu0 0.0
        %473 = vmatpush1.msra.mxu0 0.0
        %474 = vmatprep.subr.mxu0 0.0
        %475 = vmatpush1.msra.mxu0 0.0
        %476 = vmatprep.subr.mxu0 0.0
        %477 = vmatpush1.msra.mxu0 0.0
        %478 = vmatprep.subr.mxu0 0.0
        %479 = vmatpush1.msra.mxu0 0.0
        %480 = vmatprep.subr.mxu0 0.0
        %481 = vmatpush1.msra.mxu0 0.0
        %482 = vmatprep.subr.mxu0 0.0
        %483 = vmatpush1.msra.mxu0 0.0
        %484 = vmatprep.subr.mxu0 0.0
        %485 = vmatpush1.msra.mxu0 0.0
        %486 = vmatprep.mubr.f32.mxu0 0.0
        %487 = vmatmul.mubr.f32.gmra.mrb[0].mxu0 %v339
        %v488 = vpop.f32.mrb[0].mxu0
        %v489 = vadd.f32 %v420, %v488
        %v490 = vpop.f32.mrb[0].mxu0
        %491 = vdwg.mxu0
        %v492 = vmul.f32 %v489, 0.5
        %v493 = vmul.f32 %v489, 0.70710677
        %v494 = verf.f32.pop %v493
        %v495 = vadd.f32 %v494, 1.0
        %v496 = vmul.f32 %v492, %v495
        %v497 = vmul.f32 %v408, %v496
        %498 = vst.msk [vmem:[%s318] sm:$0xff] %vm337, %v497
        %s499 = sand.u32 %s175, 1
        %s500 = scalar_lea.sflag [#allocation4], %s499
        %s501 = sand.u32 %s175, 1
        %s502 = smul.addr %s501, 8
        %s503 = scalar_lea.vmem [#allocation8], %s502
        // Predicated region
        $region53: #{tpu_custom_call.1} parent=39 // pred_check
          %p504 = pneg %p185
        $region54: #{tpu_custom_call.1} parent=39 // pred_check_branch
          %506 = sbr.rel (%p504) target = $region56
        $region55: #{tpu_custom_call.1} parent=39 // pred_region
          %s508 = ssub.s32 128, 128
          %509 = vsyncadd %s500, %s508
          %s510 = sadd.s32 %s28, %s27
          %s511 = smul.addr %s510, 128
          %s512 = scalar_lea.hbm %s5, %s511
          %s514 = sshll.u32 %s503, 4
          %s515 = int_to_ptr.vmem [resolvable:$true] %s514
          %517 = dma.vmem_to_hbm [thread:$0]  %s515, 128, %s512, %s500
        $region56: #{tpu_custom_call.1} parent=39 // pred_fallthru
          _
      $region40: #{tpu_custom_call.1} parent=5 // pred_fallthru
        _
      %p518 = scmp.le.s32.totalorder 2, %s18
      // Predicated region
      $region57: #{tpu_custom_call.1} parent=5 // pred_check
        %p519 = pneg %p518
      $region58: #{tpu_custom_call.1} parent=5 // pred_check_branch
        %521 = sbr.rel (%p519) target = $region60
      $region59: #{tpu_custom_call.1} parent=5 // pred_region
        %s522 = ssub.s32 %s18, 2
        // Predicated region
        $region61: #{tpu_custom_call.1} parent=59 // pred_check
          %p523 = pneg %p191
        $region62: #{tpu_custom_call.1} parent=59 // pred_check_branch
          %525 = sbr.rel (%p523) target = $region64
        $region63: #{tpu_custom_call.1} parent=59 // pred_region
          %s526 = sand.u32 %s176, 1
          %s527 = scalar_lea.sflag [#allocation4], %s526
          %s528 = sand.u32 %s176, 1
          %s529 = smul.addr %s528, 8
          %s530 = scalar_lea.vmem [#allocation8], %s529
          %531 = dma.done %s527, 128
        $region64: #{tpu_custom_call.1} parent=59 // pred_fallthru
          _
      $region60: #{tpu_custom_call.1} parent=5 // pred_fallthru
        _
    $region6: #{tpu_custom_call.1} parent=1 // loop_footer
      %s22 = sadd.s32 1, %s18
    $region7: #{tpu_custom_call.1} parent=1 // loop_footer_branch
      %17 = sbr.rel target = $region3
    $region8: #{tpu_custom_call.1} parent=1 // loop_exit
      _
    %532 = vsyncpa [#allocation3], 1
    %s533 = scalar_lea.sflag [#allocation3], 1
    %534 = vsyncpa %s533, 1
    %535 = vsyncpa [#allocation6], 1
    %536 = vsyncpa [#allocation4], 1
    %s537 = scalar_lea.sflag [#allocation4], 1
    %538 = vsyncpa %s537, 1

</llo_original>
